<compile_context>
chip_gen: v5e
topology: v5e:2x2
jax: 0.10.0
libtpu: 0.0.40
codegen_flags: <defaults>
</compile_context>

<pallas_src>
import functools

import jax
import jax.numpy as jnp
from jax import lax
from jax.experimental import pallas as pl
from jax.experimental.pallas import tpu as pltpu

EPS = 1e-5


def _conv_partials_kernel(xw_ref, w_ref, y_ref, part_ref, *, kh_kw_off, hw):
    # xw_ref : [1, KW, Cin, Hp*Wout]  W-shifted flattened padded input (1 image)
    # w_ref  : [KH, KW, Cout, Cin]    per-tap weight matrices
    # y_ref  : [1, Cout, HW]          conv output, lane-dense HW axis
    # part_ref:[1, 2, Cout, 1]        per-image [sum, sum-of-squares]
    acc = None
    for kh, kw, off in kh_kw_off:               # KK accumulated MXU dots
        xs = xw_ref[0, kw, :, off:off + hw]     # [Cin, HW] static lane window
        tap = jnp.dot(w_ref[kh, kw], xs, preferred_element_type=jnp.float32)
        acc = tap if acc is None else acc + tap
    y_ref[0] = acc.astype(y_ref.dtype)
    # BN partials for this M-tile (combined across tiles in pass 2).
    part_ref[0, 0] = jnp.sum(acc, axis=-1, keepdims=True)
    part_ref[0, 1] = jnp.sum(acc * acc, axis=-1, keepdims=True)


def _bn_relu_kernel(y_ref, part_ref, gb_ref, o_ref, *, n_part, inv_count):
    # y_ref   : [1, Cout, tile_hw]
    # part_ref: [N, 2, Cout, 1]  all per-tile partials (tiny, block-constant)
    # gb_ref  : [2, Cout, 1]     gamma / beta folded into one operand
    # o_ref   : [1, Cout, tile_hw]
    total = part_ref[0]                             # [2, Cout, 1]
    for i in range(1, n_part):                      # static, tiny combine
        total = total + part_ref[i]
    mean = total[0] * inv_count                     # [Cout, 1]
    var = jnp.maximum(total[1] * inv_count - mean * mean, 0.0)
    gb = gb_ref[...]
    scale = gb[0] * lax.rsqrt(var + EPS)            # [Cout, 1]
    shift = gb[1] - mean * scale
    o_ref[0] = jnp.maximum(y_ref[0] * scale + shift, 0.0).astype(o_ref.dtype)


@functools.partial(jax.jit,
                   static_argnames=("padding", "dilation", "compute_dtype"))
def atrous_module_forward(x_nchw, weight, gamma, beta, *, padding, dilation,
                          compute_dtype=jnp.float32):
    """x_nchw: [N, Cin, H, W]; weight: [Cout, Cin, KH, KW] (PyTorch layout)."""
    N, Cin, H, W = x_nchw.shape
    Cout, _, KH, KW = weight.shape
    Hout = H + 2 * padding - dilation * (KH - 1)
    Wout = W + 2 * padding - dilation * (KW - 1)
    Hp, Wp = H + 2 * padding, W + 2 * padding
    HW = Hout * Wout
    count = N * HW

    # ---- wrapper-side staging (plain JAX, no transposes / big concats) -----
    xp = jnp.pad(x_nchw, ((0, 0), (0, 0),
                          (padding, padding), (padding, padding)))
    # KW W-shifted copies with (H, W) flattened so every (kh, kw) tap becomes a
    # contiguous lane window of length HW at static offset kh*dilation*Wout.
    xw = jnp.stack([xp[:, :, :, kw * dilation:kw * dilation + Wout]
                    for kw in range(KW)], axis=1)        # [N, KW, Cin, Hp, Wout]
    xw = xw.reshape(N, KW, Cin, Hp * Wout).astype(compute_dtype)

    w_t = jnp.transpose(weight, (2, 3, 0, 1)).astype(compute_dtype)  # [KH,KW,Cout,Cin]
    gamma_beta = jnp.stack([gamma, beta]).reshape(2, Cout, 1).astype(jnp.float32)

    kh_kw_off = tuple((kh, kw, kh * dilation * Wout)
                      for kh in range(KH) for kw in range(KW))

    bytes_in = xw.size * xw.dtype.itemsize + w_t.size * w_t.dtype.itemsize
    bytes_y = N * Cout * HW * 4

    # ------------- pass 1: conv (implicit im2col) + BN partials -------------
    y, partials = pl.pallas_call(
        functools.partial(_conv_partials_kernel, kh_kw_off=kh_kw_off, hw=HW),
        grid=(N,),
        in_specs=[
            pl.BlockSpec((1, KW, Cin, Hp * Wout), lambda n: (n, 0, 0, 0)),
            pl.BlockSpec((KH, KW, Cout, Cin), lambda n: (0, 0, 0, 0)),
        ],
        out_specs=[
            pl.BlockSpec((1, Cout, HW), lambda n: (n, 0, 0)),
            pl.BlockSpec((1, 2, Cout, 1), lambda n: (n, 0, 0, 0)),
        ],
        out_shape=[
            jax.ShapeDtypeStruct((N, Cout, HW), jnp.float32),
            jax.ShapeDtypeStruct((N, 2, Cout, 1), jnp.float32),
        ],
        compiler_params=pltpu.CompilerParams(
            dimension_semantics=("parallel",),
            vmem_limit_bytes=32 * 1024 * 1024),
        cost_estimate=pl.CostEstimate(
            flops=2 * Cout * Cin * KH * KW * count, transcendentals=0,
            bytes_accessed=bytes_in + bytes_y + N * 2 * Cout * 4),
    )(xw, w_t)

    # ------ pass 2: BN finalize (stats combine + scale/shift) + ReLU --------
    tile_hw = HW
    for cand in (2048, 1024, 512, 256, 128):    # largest lane-dense tile
        if HW % cand == 0:
            tile_hw = cand
            break
    n_hw = HW // tile_hw

    out = pl.pallas_call(
        functools.partial(_bn_relu_kernel, n_part=N, inv_count=1.0 / count),
        grid=(N, n_hw),
        in_specs=[
            pl.BlockSpec((1, Cout, tile_hw), lambda n, j: (n, 0, j)),
            pl.BlockSpec((N, 2, Cout, 1), lambda n, j: (0, 0, 0, 0)),
            pl.BlockSpec((2, Cout, 1), lambda n, j: (0, 0, 0)),
        ],
        out_specs=pl.BlockSpec((1, Cout, tile_hw), lambda n, j: (n, 0, j)),
        out_shape=jax.ShapeDtypeStruct((N, Cout, HW), x_nchw.dtype),
        compiler_params=pltpu.CompilerParams(
            dimension_semantics=("parallel", "parallel"),
            vmem_limit_bytes=32 * 1024 * 1024),
        cost_estimate=pl.CostEstimate(
            flops=4 * N * Cout * HW, transcendentals=Cout,
            bytes_accessed=2 * bytes_y),
    )(y, partials, gamma_beta)

    # NCHW view: pure minor-dim split (no transpose / extra HBM round trip).
    return out.reshape(N, Cout, Hout, Wout)


def _reference(x_nchw, weight, gamma, beta, *, padding, dilation):
    y = lax.conv_general_dilated(
        x_nchw, weight, window_strides=(1, 1),
        padding=[(padding, padding), (padding, padding)],
        rhs_dilation=(dilation, dilation),
        dimension_numbers=("NCHW", "OIHW", "NCHW"))
    mean = jnp.mean(y, axis=(0, 2, 3), keepdims=True)
    var = jnp.mean((y - mean) ** 2, axis=(0, 2, 3), keepdims=True)
    yn = (y - mean) / jnp.sqrt(var + EPS) * gamma.reshape(1, -1, 1, 1) \
        + beta.reshape(1, -1, 1, 1)
    return jnp.maximum(yn, 0.0)


if __name__ == "__main__":
    # _AtrousModule(inplanes=4, planes=8, kernel_size=3, padding=2, dilation=2)
    N, Cin, H, W = 2, 4, 16, 16
    Cout, K = 8, 3
    padding = dilation = 2

    key = jax.random.PRNGKey(0)
    kx, kw = jax.random.split(key)
    x = jax.random.normal(kx, (N, Cin, H, W), dtype=jnp.float32)

    # kaiming_normal_ (fan_in, relu gain): std = sqrt(2 / (Cin * K * K))
    std = (2.0 / (Cin * K * K)) ** 0.5
    weight = std * jax.random.normal(kw, (Cout, Cin, K, K), dtype=jnp.float32)
    gamma = jnp.ones((Cout,), dtype=jnp.float32)    # BatchNorm weight = 1
    beta = jnp.zeros((Cout,), dtype=jnp.float32)    # BatchNorm bias = 0

    # compute_dtype=jnp.float32 here so the check can be tight; use
    # jnp.bfloat16 for production shapes on v5e/v6e/v7x (MXU + halved DMA).
    out = atrous_module_forward(x, weight, gamma, beta,
                                padding=padding, dilation=dilation,
                                compute_dtype=jnp.float32)
    out = jax.block_until_ready(out)

    ref = _reference(x, weight, gamma, beta, padding=padding, dilation=dilation)
    assert out.shape == (N, Cout, H, W)
    assert jnp.allclose(out, ref, atol=1e-5, rtol=1e-5), \
        float(jnp.max(jnp.abs(out - ref)))

    print("KERNEL_OK")
</pallas_src>

<mosaic_0001>
module attributes {stable_mosaic.version = 11 : i64} {
  func.func @_bn_relu_kernel(%arg0: i32, %arg1: i32, %arg2: memref<1x8x256xf32, #tpu.memory_space<vmem>>, %arg3: memref<2x2x8x1xf32, #tpu.memory_space<vmem>>, %arg4: memref<2x8x1xf32, #tpu.memory_space<vmem>>, %arg5: memref<1x8x256xf32, #tpu.memory_space<vmem>>) attributes {dimension_semantics = [#tpu.dimension_semantics<parallel>, #tpu.dimension_semantics<parallel>], iteration_bounds = array<i64: 2, 1>, scalar_prefetch = 0 : i64, scratch_operands = 0 : i64, tpu.core_type = #tpu.core_type<tc>, window_params = [{transform_indices = @transform_0, window_bounds = array<i64: 1, 8, 256>}, {pipeline_mode = #tpu.pipeline_mode<synchronous>, transform_indices = @transform_1, window_bounds = array<i64: 2, 2, 8, 1>}, {pipeline_mode = #tpu.pipeline_mode<synchronous>, transform_indices = @transform_2, window_bounds = array<i64: 2, 8, 1>}, {transform_indices = @transform_3, window_bounds = array<i64: 1, 8, 256>}]} {
    %c0 = arith.constant 0 : index
    %c0_0 = arith.constant 0 : index
    %c0_1 = arith.constant 0 : index
    %c0_2 = arith.constant 0 : index
    %0 = vector.load %arg3[%c0, %c0_0, %c0_1, %c0_2] : memref<2x2x8x1xf32, #tpu.memory_space<vmem>>, vector<1x2x8x1xf32>
    %1 = vector.shape_cast %0 : vector<1x2x8x1xf32> to vector<2x8x1xf32>
    %c1 = arith.constant 1 : index
    %c0_3 = arith.constant 0 : index
    %c0_4 = arith.constant 0 : index
    %c0_5 = arith.constant 0 : index
    %2 = vector.load %arg3[%c1, %c0_3, %c0_4, %c0_5] : memref<2x2x8x1xf32, #tpu.memory_space<vmem>>, vector<1x2x8x1xf32>
    %3 = vector.shape_cast %2 : vector<1x2x8x1xf32> to vector<2x8x1xf32>
    %4 = arith.addf %1, %3 : vector<2x8x1xf32>
    %5 = vector.extract_strided_slice %4 {offsets = [0, 0, 0], sizes = [1, 8, 1], strides = [1, 1, 1]} : vector<2x8x1xf32> to vector<1x8x1xf32>
    %6 = vector.shape_cast %5 : vector<1x8x1xf32> to vector<8x1xf32>
    %cst = arith.constant 0.001953125 : f32
    %7 = vector.broadcast %cst : f32 to vector<8x1xf32>
    %8 = arith.mulf %6, %7 : vector<8x1xf32>
    %9 = vector.extract_strided_slice %4 {offsets = [1, 0, 0], sizes = [1, 8, 1], strides = [1, 1, 1]} : vector<2x8x1xf32> to vector<1x8x1xf32>
    %10 = vector.shape_cast %9 : vector<1x8x1xf32> to vector<8x1xf32>
    %cst_6 = arith.constant 0.001953125 : f32
    %11 = vector.broadcast %cst_6 : f32 to vector<8x1xf32>
    %12 = arith.mulf %10, %11 : vector<8x1xf32>
    %13 = arith.mulf %8, %8 : vector<8x1xf32>
    %14 = arith.subf %12, %13 : vector<8x1xf32>
    %cst_7 = arith.constant 0.000000e+00 : f32
    %15 = vector.broadcast %cst_7 : f32 to vector<8x1xf32>
    %16 = arith.maximumf %14, %15 : vector<8x1xf32>
    %c0_8 = arith.constant 0 : index
    %c0_9 = arith.constant 0 : index
    %c0_10 = arith.constant 0 : index
    %17 = vector.load %arg4[%c0_8, %c0_9, %c0_10] : memref<2x8x1xf32, #tpu.memory_space<vmem>>, vector<2x8x1xf32>
    %18 = vector.extract_strided_slice %17 {offsets = [0, 0, 0], sizes = [1, 8, 1], strides = [1, 1, 1]} : vector<2x8x1xf32> to vector<1x8x1xf32>
    %19 = vector.shape_cast %18 : vector<1x8x1xf32> to vector<8x1xf32>
    %cst_11 = arith.constant 9.99999974E-6 : f32
    %20 = vector.broadcast %cst_11 : f32 to vector<8x1xf32>
    %21 = arith.addf %16, %20 : vector<8x1xf32>
    %22 = math.rsqrt %21 : vector<8x1xf32>
    %23 = arith.mulf %19, %22 : vector<8x1xf32>
    %24 = vector.extract_strided_slice %17 {offsets = [1, 0, 0], sizes = [1, 8, 1], strides = [1, 1, 1]} : vector<2x8x1xf32> to vector<1x8x1xf32>
    %25 = vector.shape_cast %24 : vector<1x8x1xf32> to vector<8x1xf32>
    %26 = arith.mulf %8, %23 : vector<8x1xf32>
    %27 = arith.subf %25, %26 : vector<8x1xf32>
    %c0_12 = arith.constant 0 : index
    %c0_13 = arith.constant 0 : index
    %c0_14 = arith.constant 0 : index
    %28 = vector.load %arg2[%c0_12, %c0_13, %c0_14] : memref<1x8x256xf32, #tpu.memory_space<vmem>>, vector<1x8x256xf32>
    %29 = vector.shape_cast %28 : vector<1x8x256xf32> to vector<8x256xf32>
    %30 = vector.broadcast %23 : vector<8x1xf32> to vector<8x256xf32>
    %31 = arith.mulf %29, %30 : vector<8x256xf32>
    %32 = vector.broadcast %27 : vector<8x1xf32> to vector<8x256xf32>
    %33 = arith.addf %31, %32 : vector<8x256xf32>
    %cst_15 = arith.constant 0.000000e+00 : f32
    %34 = vector.broadcast %cst_15 : f32 to vector<8x256xf32>
    %35 = arith.maximumf %33, %34 : vector<8x256xf32>
    %c0_16 = arith.constant 0 : index
    %c0_17 = arith.constant 0 : index
    %c0_18 = arith.constant 0 : index
    %36 = vector.load %arg5[%c0_16, %c0_17, %c0_18] : memref<1x8x256xf32, #tpu.memory_space<vmem>>, vector<1x8x256xf32>
    %37 = vector.shape_cast %36 : vector<1x8x256xf32> to vector<8x256xf32>
    %38 = vector.shape_cast %35 : vector<8x256xf32> to vector<1x8x256xf32>
    tpu.vector_store %arg5[%c0_16, %c0_17, %c0_18], %38 {strides = array<i32>} : memref<1x8x256xf32, #tpu.memory_space<vmem>>, vector<1x8x256xf32>,
    return
  }
  func.func @transform_0(%arg0: i32, %arg1: i32) -> (i32, i32, i32) {
    %c0_i32 = arith.constant 0 : i32
    %c0_i32_0 = arith.constant 0 : i32
    return %arg0, %c0_i32, %arg1 : i32, i32, i32
  }
  func.func @transform_1(%arg0: i32, %arg1: i32) -> (i32, i32, i32, i32) {
    %c0_i32 = arith.constant 0 : i32
    %c0_i32_0 = arith.constant 0 : i32
    %c0_i32_1 = arith.constant 0 : i32
    %c0_i32_2 = arith.constant 0 : i32
    %c0_i32_3 = arith.constant 0 : i32
    return %c0_i32, %c0_i32_0, %c0_i32_1, %c0_i32_2 : i32, i32, i32, i32
  }
  func.func @transform_2(%arg0: i32, %arg1: i32) -> (i32, i32, i32) {
    %c0_i32 = arith.constant 0 : i32
    %c0_i32_0 = arith.constant 0 : i32
    %c0_i32_1 = arith.constant 0 : i32
    %c0_i32_2 = arith.constant 0 : i32
    return %c0_i32, %c0_i32_0, %c0_i32_1 : i32, i32, i32
  }
  func.func @transform_3(%arg0: i32, %arg1: i32) -> (i32, i32, i32) {
    %c0_i32 = arith.constant 0 : i32
    %c0_i32_0 = arith.constant 0 : i32
    return %arg0, %c0_i32, %arg1 : i32, i32, i32
  }
}

module attributes {stable_mosaic.version = 11 : i64} {
  func.func @_conv_partials_kernel(%arg0: i32, %arg1: memref<1x3x4x320xf32, #tpu.memory_space<vmem>>, %arg2: memref<3x3x8x4xf32, #tpu.memory_space<vmem>>, %arg3: memref<1x8x256xf32, #tpu.memory_space<vmem>>, %arg4: memref<1x2x8x1xf32, #tpu.memory_space<vmem>>) attributes {dimension_semantics = [#tpu.dimension_semantics<parallel>], iteration_bounds = array<i64: 2>, scalar_prefetch = 0 : i64, scratch_operands = 0 : i64, tpu.core_type = #tpu.core_type<tc>, window_params = [{transform_indices = @transform_0, window_bounds = array<i64: 1, 3, 4, 320>}, {pipeline_mode = #tpu.pipeline_mode<synchronous>, transform_indices = @transform_1, window_bounds = array<i64: 3, 3, 8, 4>}, {transform_indices = @transform_2, window_bounds = array<i64: 1, 8, 256>}, {transform_indices = @transform_3, window_bounds = array<i64: 1, 2, 8, 1>}]} {
    %c0 = arith.constant 0 : index
    %c0_0 = arith.constant 0 : index
    %c0_1 = arith.constant 0 : index
    %c0_2 = arith.constant 0 : index
    %0 = vector.load %arg1[%c0, %c0_0, %c0_1, %c0_2] : memref<1x3x4x320xf32, #tpu.memory_space<vmem>>, vector<1x1x4x256xf32>
    %1 = vector.shape_cast %0 : vector<1x1x4x256xf32> to vector<4x256xf32>
    %c0_3 = arith.constant 0 : index
    %c0_4 = arith.constant 0 : index
    %c0_5 = arith.constant 0 : index
    %c0_6 = arith.constant 0 : index
    %2 = vector.load %arg2[%c0_3, %c0_4, %c0_5, %c0_6] : memref<3x3x8x4xf32, #tpu.memory_space<vmem>>, vector<1x1x8x4xf32>
    %3 = vector.shape_cast %2 : vector<1x1x8x4xf32> to vector<8x4xf32>
    %cst = arith.constant dense<0.000000e+00> : vector<8x256xf32>
    %4 = tpu.matmul %3, %1, %cst {dimension_numbers = #tpu.dot_dimension_numbers<[1], [0], [0], [1], [0, 0, 1, 1], [], []>} : vector<8x4xf32>, vector<4x256xf32>, vector<8x256xf32> -> vector<8x256xf32>
    %c0_7 = arith.constant 0 : index
    %c1 = arith.constant 1 : index
    %c0_8 = arith.constant 0 : index
    %c0_9 = arith.constant 0 : index
    %5 = vector.load %arg1[%c0_7, %c1, %c0_8, %c0_9] : memref<1x3x4x320xf32, #tpu.memory_space<vmem>>, vector<1x1x4x256xf32>
    %6 = vector.shape_cast %5 : vector<1x1x4x256xf32> to vector<4x256xf32>
    %c0_10 = arith.constant 0 : index
    %c1_11 = arith.constant 1 : index
    %c0_12 = arith.constant 0 : index
    %c0_13 = arith.constant 0 : index
    %7 = vector.load %arg2[%c0_10, %c1_11, %c0_12, %c0_13] : memref<3x3x8x4xf32, #tpu.memory_space<vmem>>, vector<1x1x8x4xf32>
    %8 = vector.shape_cast %7 : vector<1x1x8x4xf32> to vector<8x4xf32>
    %cst_14 = arith.constant dense<0.000000e+00> : vector<8x256xf32>
    %9 = tpu.matmul %8, %6, %cst_14 {dimension_numbers = #tpu.dot_dimension_numbers<[1], [0], [0], [1], [0, 0, 1, 1], [], []>} : vector<8x4xf32>, vector<4x256xf32>, vector<8x256xf32> -> vector<8x256xf32>
    %10 = arith.addf %4, %9 : vector<8x256xf32>
    %c0_15 = arith.constant 0 : index
    %c2 = arith.constant 2 : index
    %c0_16 = arith.constant 0 : index
    %c0_17 = arith.constant 0 : index
    %11 = vector.load %arg1[%c0_15, %c2, %c0_16, %c0_17] : memref<1x3x4x320xf32, #tpu.memory_space<vmem>>, vector<1x1x4x256xf32>
    %12 = vector.shape_cast %11 : vector<1x1x4x256xf32> to vector<4x256xf32>
    %c0_18 = arith.constant 0 : index
    %c2_19 = arith.constant 2 : index
    %c0_20 = arith.constant 0 : index
    %c0_21 = arith.constant 0 : index
    %13 = vector.load %arg2[%c0_18, %c2_19, %c0_20, %c0_21] : memref<3x3x8x4xf32, #tpu.memory_space<vmem>>, vector<1x1x8x4xf32>
    %14 = vector.shape_cast %13 : vector<1x1x8x4xf32> to vector<8x4xf32>
    %cst_22 = arith.constant dense<0.000000e+00> : vector<8x256xf32>
    %15 = tpu.matmul %14, %12, %cst_22 {dimension_numbers = #tpu.dot_dimension_numbers<[1], [0], [0], [1], [0, 0, 1, 1], [], []>} : vector<8x4xf32>, vector<4x256xf32>, vector<8x256xf32> -> vector<8x256xf32>
    %16 = arith.addf %10, %15 : vector<8x256xf32>
    %c0_23 = arith.constant 0 : index
    %c0_24 = arith.constant 0 : index
    %c0_25 = arith.constant 0 : index
    %c32 = arith.constant 32 : index
    %17 = vector.load %arg1[%c0_23, %c0_24, %c0_25, %c32] : memref<1x3x4x320xf32, #tpu.memory_space<vmem>>, vector<1x1x4x256xf32>
    %18 = vector.shape_cast %17 : vector<1x1x4x256xf32> to vector<4x256xf32>
    %c1_26 = arith.constant 1 : index
    %c0_27 = arith.constant 0 : index
    %c0_28 = arith.constant 0 : index
    %c0_29 = arith.constant 0 : index
    %19 = vector.load %arg2[%c1_26, %c0_27, %c0_28, %c0_29] : memref<3x3x8x4xf32, #tpu.memory_space<vmem>>, vector<1x1x8x4xf32>
    %20 = vector.shape_cast %19 : vector<1x1x8x4xf32> to vector<8x4xf32>
    %cst_30 = arith.constant dense<0.000000e+00> : vector<8x256xf32>
    %21 = tpu.matmul %20, %18, %cst_30 {dimension_numbers = #tpu.dot_dimension_numbers<[1], [0], [0], [1], [0, 0, 1, 1], [], []>} : vector<8x4xf32>, vector<4x256xf32>, vector<8x256xf32> -> vector<8x256xf32>
    %22 = arith.addf %16, %21 : vector<8x256xf32>
    %c0_31 = arith.constant 0 : index
    %c1_32 = arith.constant 1 : index
    %c0_33 = arith.constant 0 : index
    %c32_34 = arith.constant 32 : index
    %23 = vector.load %arg1[%c0_31, %c1_32, %c0_33, %c32_34] : memref<1x3x4x320xf32, #tpu.memory_space<vmem>>, vector<1x1x4x256xf32>
    %24 = vector.shape_cast %23 : vector<1x1x4x256xf32> to vector<4x256xf32>
    %c1_35 = arith.constant 1 : index
    %c1_36 = arith.constant 1 : index
    %c0_37 = arith.constant 0 : index
    %c0_38 = arith.constant 0 : index
    %25 = vector.load %arg2[%c1_35, %c1_36, %c0_37, %c0_38] : memref<3x3x8x4xf32, #tpu.memory_space<vmem>>, vector<1x1x8x4xf32>
    %26 = vector.shape_cast %25 : vector<1x1x8x4xf32> to vector<8x4xf32>
    %cst_39 = arith.constant dense<0.000000e+00> : vector<8x256xf32>
    %27 = tpu.matmul %26, %24, %cst_39 {dimension_numbers = #tpu.dot_dimension_numbers<[1], [0], [0], [1], [0, 0, 1, 1], [], []>} : vector<8x4xf32>, vector<4x256xf32>, vector<8x256xf32> -> vector<8x256xf32>
    %28 = arith.addf %22, %27 : vector<8x256xf32>
    %c0_40 = arith.constant 0 : index
    %c2_41 = arith.constant 2 : index
    %c0_42 = arith.constant 0 : index
    %c32_43 = arith.constant 32 : index
    %29 = vector.load %arg1[%c0_40, %c2_41, %c0_42, %c32_43] : memref<1x3x4x320xf32, #tpu.memory_space<vmem>>, vector<1x1x4x256xf32>
    %30 = vector.shape_cast %29 : vector<1x1x4x256xf32> to vector<4x256xf32>
    %c1_44 = arith.constant 1 : index
    %c2_45 = arith.constant 2 : index
    %c0_46 = arith.constant 0 : index
    %c0_47 = arith.constant 0 : index
    %31 = vector.load %arg2[%c1_44, %c2_45, %c0_46, %c0_47] : memref<3x3x8x4xf32, #tpu.memory_space<vmem>>, vector<1x1x8x4xf32>
    %32 = vector.shape_cast %31 : vector<1x1x8x4xf32> to vector<8x4xf32>
    %cst_48 = arith.constant dense<0.000000e+00> : vector<8x256xf32>
    %33 = tpu.matmul %32, %30, %cst_48 {dimension_numbers = #tpu.dot_dimension_numbers<[1], [0], [0], [1], [0, 0, 1, 1], [], []>} : vector<8x4xf32>, vector<4x256xf32>, vector<8x256xf32> -> vector<8x256xf32>
    %34 = arith.addf %28, %33 : vector<8x256xf32>
    %c0_49 = arith.constant 0 : index
    %c0_50 = arith.constant 0 : index
    %c0_51 = arith.constant 0 : index
    %c64 = arith.constant 64 : index
    %35 = vector.load %arg1[%c0_49, %c0_50, %c0_51, %c64] : memref<1x3x4x320xf32, #tpu.memory_space<vmem>>, vector<1x1x4x256xf32>
    %36 = vector.shape_cast %35 : vector<1x1x4x256xf32> to vector<4x256xf32>
    %c2_52 = arith.constant 2 : index
    %c0_53 = arith.constant 0 : index
    %c0_54 = arith.constant 0 : index
    %c0_55 = arith.constant 0 : index
    %37 = vector.load %arg2[%c2_52, %c0_53, %c0_54, %c0_55] : memref<3x3x8x4xf32, #tpu.memory_space<vmem>>, vector<1x1x8x4xf32>
    %38 = vector.shape_cast %37 : vector<1x1x8x4xf32> to vector<8x4xf32>
    %cst_56 = arith.constant dense<0.000000e+00> : vector<8x256xf32>
    %39 = tpu.matmul %38, %36, %cst_56 {dimension_numbers = #tpu.dot_dimension_numbers<[1], [0], [0], [1], [0, 0, 1, 1], [], []>} : vector<8x4xf32>, vector<4x256xf32>, vector<8x256xf32> -> vector<8x256xf32>
    %40 = arith.addf %34, %39 : vector<8x256xf32>
    %c0_57 = arith.constant 0 : index
    %c1_58 = arith.constant 1 : index
    %c0_59 = arith.constant 0 : index
    %c64_60 = arith.constant 64 : index
    %41 = vector.load %arg1[%c0_57, %c1_58, %c0_59, %c64_60] : memref<1x3x4x320xf32, #tpu.memory_space<vmem>>, vector<1x1x4x256xf32>
    %42 = vector.shape_cast %41 : vector<1x1x4x256xf32> to vector<4x256xf32>
    %c2_61 = arith.constant 2 : index
    %c1_62 = arith.constant 1 : index
    %c0_63 = arith.constant 0 : index
    %c0_64 = arith.constant 0 : index
    %43 = vector.load %arg2[%c2_61, %c1_62, %c0_63, %c0_64] : memref<3x3x8x4xf32, #tpu.memory_space<vmem>>, vector<1x1x8x4xf32>
    %44 = vector.shape_cast %43 : vector<1x1x8x4xf32> to vector<8x4xf32>
    %cst_65 = arith.constant dense<0.000000e+00> : vector<8x256xf32>
    %45 = tpu.matmul %44, %42, %cst_65 {dimension_numbers = #tpu.dot_dimension_numbers<[1], [0], [0], [1], [0, 0, 1, 1], [], []>} : vector<8x4xf32>, vector<4x256xf32>, vector<8x256xf32> -> vector<8x256xf32>
    %46 = arith.addf %40, %45 : vector<8x256xf32>
    %c0_66 = arith.constant 0 : index
    %c2_67 = arith.constant 2 : index
    %c0_68 = arith.constant 0 : index
    %c64_69 = arith.constant 64 : index
    %47 = vector.load %arg1[%c0_66, %c2_67, %c0_68, %c64_69] : memref<1x3x4x320xf32, #tpu.memory_space<vmem>>, vector<1x1x4x256xf32>
    %48 = vector.shape_cast %47 : vector<1x1x4x256xf32> to vector<4x256xf32>
    %c2_70 = arith.constant 2 : index
    %c2_71 = arith.constant 2 : index
    %c0_72 = arith.constant 0 : index
    %c0_73 = arith.constant 0 : index
    %49 = vector.load %arg2[%c2_70, %c2_71, %c0_72, %c0_73] : memref<3x3x8x4xf32, #tpu.memory_space<vmem>>, vector<1x1x8x4xf32>
    %50 = vector.shape_cast %49 : vector<1x1x8x4xf32> to vector<8x4xf32>
    %cst_74 = arith.constant dense<0.000000e+00> : vector<8x256xf32>
    %51 = tpu.matmul %50, %48, %cst_74 {dimension_numbers = #tpu.dot_dimension_numbers<[1], [0], [0], [1], [0, 0, 1, 1], [], []>} : vector<8x4xf32>, vector<4x256xf32>, vector<8x256xf32> -> vector<8x256xf32>
    %52 = arith.addf %46, %51 : vector<8x256xf32>
    %c0_75 = arith.constant 0 : index
    %c0_76 = arith.constant 0 : index
    %c0_77 = arith.constant 0 : index
    %53 = vector.load %arg3[%c0_75, %c0_76, %c0_77] : memref<1x8x256xf32, #tpu.memory_space<vmem>>, vector<1x8x256xf32>
    %54 = vector.shape_cast %53 : vector<1x8x256xf32> to vector<8x256xf32>
    %55 = vector.shape_cast %52 : vector<8x256xf32> to vector<1x8x256xf32>
    tpu.vector_store %arg3[%c0_75, %c0_76, %c0_77], %55 {strides = array<i32>} : memref<1x8x256xf32, #tpu.memory_space<vmem>>, vector<1x8x256xf32>,
    %cst_78 = arith.constant dense<0.000000e+00> : vector<8xf32>
    %56 = vector.multi_reduction <add>, %52, %cst_78 [1] : vector<8x256xf32> to vector<8xf32>
    %57 = vector.shape_cast %56 : vector<8xf32> to vector<8x1xf32>
    %c0_79 = arith.constant 0 : index
    %c0_80 = arith.constant 0 : index
    %c0_81 = arith.constant 0 : index
    %c0_82 = arith.constant 0 : index
    %58 = vector.load %arg4[%c0_79, %c0_80, %c0_81, %c0_82] : memref<1x2x8x1xf32, #tpu.memory_space<vmem>>, vector<1x1x8x1xf32>
    %59 = vector.shape_cast %58 : vector<1x1x8x1xf32> to vector<8x1xf32>
    %60 = vector.shape_cast %57 : vector<8x1xf32> to vector<1x1x8x1xf32>
    tpu.vector_store %arg4[%c0_79, %c0_80, %c0_81, %c0_82], %60 {strides = array<i32>} : memref<1x2x8x1xf32, #tpu.memory_space<vmem>>, vector<1x1x8x1xf32>,
    %61 = arith.mulf %52, %52 : vector<8x256xf32>
    %cst_83 = arith.constant dense<0.000000e+00> : vector<8xf32>
    %62 = vector.multi_reduction <add>, %61, %cst_83 [1] : vector<8x256xf32> to vector<8xf32>
    %63 = vector.shape_cast %62 : vector<8xf32> to vector<8x1xf32>
    %c0_84 = arith.constant 0 : index
    %c1_85 = arith.constant 1 : index
    %c0_86 = arith.constant 0 : index
    %c0_87 = arith.constant 0 : index
    %64 = vector.load %arg4[%c0_84, %c1_85, %c0_86, %c0_87] : memref<1x2x8x1xf32, #tpu.memory_space<vmem>>, vector<1x1x8x1xf32>
    %65 = vector.shape_cast %64 : vector<1x1x8x1xf32> to vector<8x1xf32>
    %66 = vector.shape_cast %63 : vector<8x1xf32> to vector<1x1x8x1xf32>
    tpu.vector_store %arg4[%c0_84, %c1_85, %c0_86, %c0_87], %66 {strides = array<i32>} : memref<1x2x8x1xf32, #tpu.memory_space<vmem>>, vector<1x1x8x1xf32>,
    return
  }
  func.func @transform_0(%arg0: i32) -> (i32, i32, i32, i32) {
    %c0_i32 = arith.constant 0 : i32
    %c0_i32_0 = arith.constant 0 : i32
    %c0_i32_1 = arith.constant 0 : i32
    %c0_i32_2 = arith.constant 0 : i32
    return %arg0, %c0_i32, %c0_i32_0, %c0_i32_1 : i32, i32, i32, i32
  }
  func.func @transform_1(%arg0: i32) -> (i32, i32, i32, i32) {
    %c0_i32 = arith.constant 0 : i32
    %c0_i32_0 = arith.constant 0 : i32
    %c0_i32_1 = arith.constant 0 : i32
    %c0_i32_2 = arith.constant 0 : i32
    %c0_i32_3 = arith.constant 0 : i32
    return %c0_i32, %c0_i32_0, %c0_i32_1, %c0_i32_2 : i32, i32, i32, i32
  }
  func.func @transform_2(%arg0: i32) -> (i32, i32, i32) {
    %c0_i32 = arith.constant 0 : i32
    %c0_i32_0 = arith.constant 0 : i32
    %c0_i32_1 = arith.constant 0 : i32
    return %arg0, %c0_i32, %c0_i32_0 : i32, i32, i32
  }
  func.func @transform_3(%arg0: i32) -> (i32, i32, i32, i32) {
    %c0_i32 = arith.constant 0 : i32
    %c0_i32_0 = arith.constant 0 : i32
    %c0_i32_1 = arith.constant 0 : i32
    %c0_i32_2 = arith.constant 0 : i32
    return %arg0, %c0_i32, %c0_i32_0, %c0_i32_1 : i32, i32, i32, i32
  }
}

</mosaic_0001>

<llo_original>
// kernel: atrous_module_forward.3
$region0: #{atrous_module_forward.3}
  #allocation0 [shape = 'u32[]', space=smem, size = 0x4, offset = 0x4, fixed_abs, tag = 'smem constant byte address 0x4 - core index']
  #allocation1 [shape = 'u32[72,128]{1,0:T(1,128)}', space=vmem, size = 0x9000, scoped, tag = 'internal scratch']
  %s0 = inlined_call_operand.vmem [shape: f32[2,8,256], index: 0, kind: input, shape index: {}]
  %s1 = inlined_call_operand.vmem [shape: f32[2,2,8,1], index: 1, kind: input, shape index: {}]
  %s2 = inlined_call_operand.vmem [shape: f32[2,8,1], index: 2, kind: input, shape index: {}]
  %s3 = inlined_call_operand.vmem [shape: f32[2,8,256], index: 3, kind: output, shape index: {}]
  %s4 = sld [smem:[#allocation0]]
  $region45: #{atrous_module_forward.3} parent=0
    _
  %s6 = ssub.s32 1, %s4
  %s7 = scalar_select 0, %s6, %s4
  loop: start=0, step=1, limit=4
  $region2: #{atrous_module_forward.3} parent=0 // loop_pre_header
    _
  $region3: #{atrous_module_forward.3} parent=0 // loop_header
    %s9 = sphi 0, %s13
    %p10 = scmp.ge.s32.totalorder %s9, 4
    %s16 = sphi 0, %s28
    %s17 = sphi 0, %s24
    %s18 = sphi 0, %s16
    %s19 = sphi 0, %s17
    %s20 = sphi 0, %s18
    %s21 = sphi 0, %s19
    %s33 = sphi 0, %s35
    %s36 = sphi 0, %s33
    %s37 = sphi 0, %s36
    %s53 = sphi 0, %s37
    %s57 = sphi 0, %s57
    %s59 = sphi 0, %s57
    %s60 = sphi 0, %s59
    %s74 = sphi 0, %s60
    %s78 = sphi 0, %s78
    %s80 = sphi 0, %s78
    %s81 = sphi 0, %s80
    %s95 = sphi 0, %s81
    %s103 = sphi 0, %s105
    %s106 = sphi 0, %s103
    %s107 = sphi 0, %s106
    %s123 = sphi 0, %s107
  $region4: #{atrous_module_forward.3} parent=0 // loop_header_branch
    %12 = sbr.rel (%p10) target = $region8
  $region5: #{atrous_module_forward.3} parent=0 // loop_body
    %s14 = ssub.s32 %s9, 1
    %s15 = ssub.s32 %s9, 2
    %s22 = sadd.s32 1, %s17
    %p23 = scmp.ge.s32.totalorder %s22, 1
    %s24 = scalar_select %p23, 0, %s22
    %s25 = sadd.s32 1, %s16
    %s26 = scalar_select %p23, %s25, %s16
    %p27 = scmp.ge.s32.totalorder %s26, 2
    %s28 = scalar_select %p27, 0, %s26
    %s29 = ssub.s32 %s16, %s28
    %s30 = ssub.s32 %s17, %s24
    %s31 = sor.u32 %s29, %s30
    %p32 = scmp.eq.s32.totalorder %s31, 0
    %s34 = sadd.s32 %s33, 1
    %s35 = scalar_select %p32, %s33, %s34
    %p38 = pneg %p32
    %p39 = scmp.eq.s32.totalorder %s9, 1
    %p40 = por %p38, %p39
    %p41 = scmp.ne.s32.totalorder %s33, %s36
    %p42 = scmp.eq.s32.totalorder %s9, 0
    %p43 = por %p41, %p42
    %p44 = scmp.ne.s32.totalorder %s33, %s36
    %p45 = scmp.eq.s32.totalorder %s14, 1
    %p46 = por %p44, %p45
    %p47 = scmp.ne.s32.totalorder %s36, %s37
    %p48 = scmp.eq.s32.totalorder %s14, 0
    %p49 = por %p47, %p48
    %p50 = scmp.ne.s32.totalorder %s36, %s37
    %p51 = scmp.eq.s32.totalorder %s15, 1
    %p52 = por %p50, %p51
    %p54 = scmp.ne.s32.totalorder %s37, %s53
    %p55 = scmp.eq.s32.totalorder %s15, 0
    %p56 = por %p54, %p55
    %s58 = sadd.s32 %s57, 1
    %p61 = scmp.eq.s32.totalorder %s9, 1
    %p62 = scmp.ne.s32.totalorder %s57, %s59
    %p63 = scmp.eq.s32.totalorder %s9, 0
    %p64 = por %p62, %p63
    %p65 = scmp.ne.s32.totalorder %s57, %s59
    %p66 = scmp.eq.s32.totalorder %s14, 1
    %p67 = por %p65, %p66
    %p68 = scmp.ne.s32.totalorder %s59, %s60
    %p69 = scmp.eq.s32.totalorder %s14, 0
    %p70 = por %p68, %p69
    %p71 = scmp.ne.s32.totalorder %s59, %s60
    %p72 = scmp.eq.s32.totalorder %s15, 1
    %p73 = por %p71, %p72
    %p75 = scmp.ne.s32.totalorder %s60, %s74
    %p76 = scmp.eq.s32.totalorder %s15, 0
    %p77 = por %p75, %p76
    %s79 = sadd.s32 %s78, 1
    %p82 = scmp.eq.s32.totalorder %s9, 1
    %p83 = scmp.ne.s32.totalorder %s78, %s80
    %p84 = scmp.eq.s32.totalorder %s9, 0
    %p85 = por %p83, %p84
    %p86 = scmp.ne.s32.totalorder %s78, %s80
    %p87 = scmp.eq.s32.totalorder %s14, 1
    %p88 = por %p86, %p87
    %p89 = scmp.ne.s32.totalorder %s80, %s81
    %p90 = scmp.eq.s32.totalorder %s14, 0
    %p91 = por %p89, %p90
    %p92 = scmp.ne.s32.totalorder %s80, %s81
    %p93 = scmp.eq.s32.totalorder %s15, 1
    %p94 = por %p92, %p93
    %p96 = scmp.ne.s32.totalorder %s81, %s95
    %p97 = scmp.eq.s32.totalorder %s15, 0
    %p98 = por %p96, %p97
    %s99 = ssub.s32 %s16, %s28
    %s100 = ssub.s32 %s17, %s24
    %s101 = sor.u32 %s99, %s100
    %p102 = scmp.eq.s32.totalorder %s101, 0
    %s104 = sadd.s32 %s103, 1
    %s105 = scalar_select %p102, %s103, %s104
    %p108 = pneg %p102
    %p109 = scmp.eq.s32.totalorder %s9, 1
    %p110 = por %p108, %p109
    %p111 = scmp.ne.s32.totalorder %s103, %s106
    %p112 = scmp.eq.s32.totalorder %s9, 0
    %p113 = por %p111, %p112
    %p114 = scmp.ne.s32.totalorder %s103, %s106
    %p115 = scmp.eq.s32.totalorder %s14, 1
    %p116 = por %p114, %p115
    %p117 = scmp.ne.s32.totalorder %s106, %s107
    %p118 = scmp.eq.s32.totalorder %s14, 0
    %p119 = por %p117, %p118
    %p120 = scmp.ne.s32.totalorder %s106, %s107
    %p121 = scmp.eq.s32.totalorder %s15, 1
    %p122 = por %p120, %p121
    %p124 = scmp.ne.s32.totalorder %s107, %s123
    %p125 = scmp.eq.s32.totalorder %s15, 0
    %p126 = por %p124, %p125
    %p127 = scmp.le.s32.totalorder 1, %s9
    %p128 = scmp.lt.s32.totalorder %s9, 3
    %p129 = pnand %p127, %p128
    %p130 = pneg %p129
    // Predicated region
    $region9: #{atrous_module_forward.3} parent=5 // pred_check
      _
    $region10: #{atrous_module_forward.3} parent=5 // pred_check_branch
      %132 = sbr.rel (%p129) target = $region12
    $region11: #{atrous_module_forward.3} parent=5 // pred_region
      %s133 = ssub.s32 %s9, 1
      // Predicated region
      $region13: #{atrous_module_forward.3} parent=11 // pred_check
        %p134 = pneg %p70
      $region14: #{atrous_module_forward.3} parent=11 // pred_check_branch
        %136 = sbr.rel (%p134) target = $region16
      $region15: #{atrous_module_forward.3} parent=11 // pred_region
        _
      $region16: #{atrous_module_forward.3} parent=11 // pred_fallthru
        _
      // Predicated region
      $region17: #{atrous_module_forward.3} parent=11 // pred_check
        %p137 = pneg %p91
      $region18: #{atrous_module_forward.3} parent=11 // pred_check_branch
        %139 = sbr.rel (%p137) target = $region20
      $region19: #{atrous_module_forward.3} parent=11 // pred_region
        _
      $region20: #{atrous_module_forward.3} parent=11 // pred_fallthru
        _
    $region12: #{atrous_module_forward.3} parent=5 // pred_fallthru
      _
    %p140 = scmp.lt.s32.totalorder %s9, 2
    // Predicated region
    $region21: #{atrous_module_forward.3} parent=5 // pred_check
      %p141 = pneg %p140
    $region22: #{atrous_module_forward.3} parent=5 // pred_check_branch
      %143 = sbr.rel (%p141) target = $region24
    $region23: #{atrous_module_forward.3} parent=5 // pred_region
      // Predicated region
      $region25: #{atrous_module_forward.3} parent=23 // pred_check
        %p144 = pneg %p43
      $region26: #{atrous_module_forward.3} parent=23 // pred_check_branch
        %146 = sbr.rel (%p144) target = $region28
      $region27: #{atrous_module_forward.3} parent=23 // pred_region
        %s147 = smul.u32 2, %s17
        %p148 = scmp.lt.s32.totalorder %s16, 1
        %s149 = scalar_select %p148, %s16, 1
        %p150 = scmp.lt.s32.totalorder %s147, 1
        %s151 = scalar_select %p150, %s147, 1
        %s152 = smul.addr %s149, 2
        %s153 = sadd.s32 %s151, %s152
        %s154 = smul.addr %s153, 8
        %s155 = scalar_lea.vmem %s0, %s154
        %s156 = smul.u32 2, %s17
      $region28: #{atrous_module_forward.3} parent=23 // pred_fallthru
        _
    $region24: #{atrous_module_forward.3} parent=5 // pred_fallthru
      _
    %p157 = scmp.le.s32.totalorder 1, %s9
    %p158 = scmp.lt.s32.totalorder %s9, 3
    %p159 = pnand %p157, %p158
    %p160 = pneg %p159
    // Predicated region
    $region29: #{atrous_module_forward.3} parent=5 // pred_check
      _
    $region30: #{atrous_module_forward.3} parent=5 // pred_check_branch
      %162 = sbr.rel (%p159) target = $region32
    $region31: #{atrous_module_forward.3} parent=5 // pred_region
      %s163 = ssub.s32 %s9, 1
      %s164 = smul.u32 2, %s19
      %p165 = scmp.lt.s32.totalorder %s18, 1
      %s166 = scalar_select %p165, %s18, 1
      %p167 = scmp.lt.s32.totalorder %s164, 1
      %s168 = scalar_select %p167, %s164, 1
      %s169 = smul.addr %s166, 2
      %s170 = sadd.s32 %s168, %s169
      %s171 = smul.addr %s170, 8
      %s172 = scalar_lea.vmem %s0, %s171
      %p173 = pneg %p49
      %p174 = pneg %p46
      %p175 = pneg %p70
      %p176 = pneg %p67
      %p177 = pneg %p91
      %p178 = pneg %p88
      %p179 = pneg %p119
      %p180 = pneg %p116
      %s181 = smul.u32 2, %s19
      %p182 = scmp.lt.s32.totalorder %s18, 1
      %s183 = scalar_select %p182, %s18, 1
      %p184 = scmp.lt.s32.totalorder %s181, 1
      %s185 = scalar_select %p184, %s181, 1
      %s186 = smul.addr %s183, 2
      %s187 = sadd.s32 %s185, %s186
      %s188 = smul.addr %s187, 8
      %s189 = scalar_lea.vmem %s3, %s188
      %s190 = smul.u32 2, %s19
      %p191 = scmp.lt.s32.totalorder %s18, 1
      %s192 = scalar_select %p191, %s18, 1
      %p193 = scmp.lt.s32.totalorder %s190, 1
      %s194 = scalar_select %p193, %s190, 1
      %s195 = smul.addr %s192, 2
      %s196 = sadd.s32 %s194, %s195
      %s197 = smul.addr %s196, 8
      %s198 = scalar_lea.vmem %s0, %s197
      %s199 = smul.u32 2, %s19
      %s200 = smul.u32 2, %s19
      %p201 = scmp.lt.s32.totalorder %s18, 1
      %s202 = scalar_select %p201, %s18, 1
      %p203 = scmp.lt.s32.totalorder %s200, 1
      %s204 = scalar_select %p203, %s200, 1
      %s205 = smul.addr %s202, 2
      %s206 = sadd.s32 %s204, %s205
      %s207 = smul.addr %s206, 8
      %s208 = scalar_lea.vmem %s3, %s207
      %s209 = smul.u32 2, %s19
      %v210 = vld [vmem:[%s1] sm:$0xff]
      %v211 = vld [vmem:[%s1 + $0x8] sm:$0xff]
      %s212 = scalar_lea.vmem %s1, 16
      %v213 = vld [vmem:[%s212] sm:$0xff]
      %v214 = vld [vmem:[%s212 + $0x8] sm:$0xff]
      %v215 = vadd.f32 %v210, %v213
      %v216 = vadd.f32 %v211, %v214
      %v217 = vmul.f32 %v215, 0.001953125
      %v218 = vmul.f32 %v216, 0.001953125
      %v219 = vmul.f32 %v217, %v217
      %v220 = vsub.f32 %v218, %v219
      %v221 = vmax.f32 %v220, 0.0
      %v222 = vld [vmem:[%s2] sm:$0xff]
      %v223 = vld [vmem:[%s2 + $0x8] sm:$0xff]
      %v224 = vadd.f32 %v221, 1e-05
      %v225 = vrsqrt.pop %v224
      %v226 = vmul.f32 %v225, %v224
      %v227 = vmul.f32 %v226, %v225
      %v228 = vmul.f32 0.5, %v227
      %v229 = vsub.f32 1.5, %v228
      %v230 = vmul.f32 %v225, %v229
      %vm231 = vweird.f32 %v224
      %vm232 = vweird.f32 %v225
      %vm233 = vmor %vm231, %vm232
      %v234 = vsel %vm233, %v225, %v230
      %v235 = vmul.f32 %v222, %v234
      %v236 = vmul.f32 %v217, %v235
      %v237 = vsub.f32 %v223, %v236
      %v238 = vld [vmem:[%s198] sm:$0xff]
      %v239 = vld [vmem:[%s198 + $0x8] sm:$0xff]
      %241 = vset.pattern.permute.xlu0 0
      %242 = vperm.xlu0 %241, %v235
      %v243 = vpop.permute.xlu0 %242
      %v245 = vmul.f32 %v238, %v243
      %v246 = vmul.f32 %v239, %v243
      %248 = vset.pattern.permute.xlu0 0
      %249 = vperm.xlu0 %248, %v237
      %v250 = vpop.permute.xlu0 %249
      %v252 = vadd.f32 %v245, %v250
      %v253 = vadd.f32 %v246, %v250
      %v254 = vmax.f32 %v252, 0.0
      %v255 = vmax.f32 %v253, 0.0
      %256 = vst [vmem:[%s208] sm:$0xff] %v254
      %257 = vst [vmem:[%s208 + $0x8] sm:$0xff] %v255
      %s258 = smul.u32 2, %s19
      %p259 = scmp.lt.s32.totalorder %s18, 1
      %s260 = scalar_select %p259, %s18, 1
      %p261 = scmp.lt.s32.totalorder %s258, 1
      %s262 = scalar_select %p261, %s258, 1
      %s263 = smul.addr %s260, 2
      %s264 = sadd.s32 %s262, %s263
      %s265 = smul.addr %s264, 8
      %s266 = scalar_lea.vmem %s3, %s265
      // Predicated region
      $region33: #{atrous_module_forward.3} parent=31 // pred_check
        %p267 = pneg %p116
      $region34: #{atrous_module_forward.3} parent=31 // pred_check_branch
        %269 = sbr.rel (%p267) target = $region36
      $region35: #{atrous_module_forward.3} parent=31 // pred_region
        %s270 = smul.u32 2, %s19
      $region36: #{atrous_module_forward.3} parent=31 // pred_fallthru
        _
    $region32: #{atrous_module_forward.3} parent=5 // pred_fallthru
      _
    %p271 = scmp.le.s32.totalorder 2, %s9
    // Predicated region
    $region37: #{atrous_module_forward.3} parent=5 // pred_check
      %p272 = pneg %p271
    $region38: #{atrous_module_forward.3} parent=5 // pred_check_branch
      %274 = sbr.rel (%p272) target = $region40
    $region39: #{atrous_module_forward.3} parent=5 // pred_region
      %s275 = ssub.s32 %s9, 2
      // Predicated region
      $region41: #{atrous_module_forward.3} parent=39 // pred_check
        %p276 = pneg %p122
      $region42: #{atrous_module_forward.3} parent=39 // pred_check_branch
        %278 = sbr.rel (%p276) target = $region44
      $region43: #{atrous_module_forward.3} parent=39 // pred_region
        %s279 = smul.u32 2, %s21
        %p280 = scmp.lt.s32.totalorder %s20, 1
        %s281 = scalar_select %p280, %s20, 1
        %p282 = scmp.lt.s32.totalorder %s279, 1
        %s283 = scalar_select %p282, %s279, 1
        %s284 = smul.addr %s281, 2
        %s285 = sadd.s32 %s283, %s284
        %s286 = smul.addr %s285, 8
        %s287 = scalar_lea.vmem %s3, %s286
      $region44: #{atrous_module_forward.3} parent=39 // pred_fallthru
        _
    $region40: #{atrous_module_forward.3} parent=5 // pred_fallthru
      _
  $region6: #{atrous_module_forward.3} parent=0 // loop_footer
    %s13 = sadd.s32 1, %s9
  $region7: #{atrous_module_forward.3} parent=0 // loop_footer_branch
    %8 = sbr.rel target = $region3
  $region8: #{atrous_module_forward.3} parent=0 // loop_exit
    _

// kernel: atrous_module_forward.2
$region0: #{atrous_module_forward.2}
  #allocation0 [shape = 'u32[]', space=smem, size = 0x4, offset = 0x4, fixed_abs, tag = 'smem constant byte address 0x4 - core index']
  #allocation1 [shape = 'u32[72,128]{1,0:T(1,128)}', space=vmem, size = 0x9000, scoped, tag = 'internal scratch']
  %s0 = inlined_call_operand.vmem [shape: f32[2,3,4,320], index: 0, kind: input, shape index: {}]
  %s1 = inlined_call_operand.vmem [shape: f32[3,3,8,4], index: 1, kind: input, shape index: {}]
  %s2 = inlined_call_operand.vmem [shape: f32[2,8,256], index: 2, kind: output, shape index: {0}]
  %s3 = inlined_call_operand.vmem [shape: f32[2,2,8,1], index: 3, kind: output, shape index: {1}]
  %4 = xla_tuple %s2, %s3
  %s5 = sld [smem:[#allocation0]]
  $region49: #{atrous_module_forward.2} parent=0
    _
  %s7 = ssub.s32 1, %s5
  %s8 = scalar_select 0, %s7, %s5
  loop: start=0, step=1, limit=4
  $region2: #{atrous_module_forward.2} parent=0 // loop_pre_header
    _
  $region3: #{atrous_module_forward.2} parent=0 // loop_header
    %s10 = sphi 0, %s14
    %p11 = scmp.ge.s32.totalorder %s10, 4
    %s20 = sphi 0, %s22
    %s23 = sphi 0, %s20
    %s24 = sphi 0, %s23
    %s40 = sphi 0, %s24
    %s44 = sphi 0, %s44
    %s46 = sphi 0, %s44
    %s47 = sphi 0, %s46
    %s61 = sphi 0, %s47
    %s67 = sphi 0, %s69
    %s70 = sphi 0, %s67
    %s71 = sphi 0, %s70
    %s87 = sphi 0, %s71
    %s93 = sphi 0, %s95
    %s96 = sphi 0, %s93
    %s97 = sphi 0, %s96
    %s113 = sphi 0, %s97
  $region4: #{atrous_module_forward.2} parent=0 // loop_header_branch
    %13 = sbr.rel (%p11) target = $region8
  $region5: #{atrous_module_forward.2} parent=0 // loop_body
    %s15 = ssub.s32 %s10, 1
    %s16 = ssub.s32 %s10, 2
    %s17 = sadd.s32 %s10, 1
    %s18 = ssub.s32 %s10, %s17
    %p19 = scmp.eq.s32.totalorder %s18, 0
    %s21 = sadd.s32 %s20, 1
    %s22 = scalar_select %p19, %s20, %s21
    %p25 = pneg %p19
    %p26 = scmp.eq.s32.totalorder %s10, 1
    %p27 = por %p25, %p26
    %p28 = scmp.ne.s32.totalorder %s20, %s23
    %p29 = scmp.eq.s32.totalorder %s10, 0
    %p30 = por %p28, %p29
    %p31 = scmp.ne.s32.totalorder %s20, %s23
    %p32 = scmp.eq.s32.totalorder %s15, 1
    %p33 = por %p31, %p32
    %p34 = scmp.ne.s32.totalorder %s23, %s24
    %p35 = scmp.eq.s32.totalorder %s15, 0
    %p36 = por %p34, %p35
    %p37 = scmp.ne.s32.totalorder %s23, %s24
    %p38 = scmp.eq.s32.totalorder %s16, 1
    %p39 = por %p37, %p38
    %p41 = scmp.ne.s32.totalorder %s24, %s40
    %p42 = scmp.eq.s32.totalorder %s16, 0
    %p43 = por %p41, %p42
    %s45 = sadd.s32 %s44, 1
    %p48 = scmp.eq.s32.totalorder %s10, 1
    %p49 = scmp.ne.s32.totalorder %s44, %s46
    %p50 = scmp.eq.s32.totalorder %s10, 0
    %p51 = por %p49, %p50
    %p52 = scmp.ne.s32.totalorder %s44, %s46
    %p53 = scmp.eq.s32.totalorder %s15, 1
    %p54 = por %p52, %p53
    %p55 = scmp.ne.s32.totalorder %s46, %s47
    %p56 = scmp.eq.s32.totalorder %s15, 0
    %p57 = por %p55, %p56
    %p58 = scmp.ne.s32.totalorder %s46, %s47
    %p59 = scmp.eq.s32.totalorder %s16, 1
    %p60 = por %p58, %p59
    %p62 = scmp.ne.s32.totalorder %s47, %s61
    %p63 = scmp.eq.s32.totalorder %s16, 0
    %p64 = por %p62, %p63
    %s65 = ssub.s32 %s10, %s17
    %p66 = scmp.eq.s32.totalorder %s65, 0
    %s68 = sadd.s32 %s67, 1
    %s69 = scalar_select %p66, %s67, %s68
    %p72 = pneg %p66
    %p73 = scmp.eq.s32.totalorder %s10, 1
    %p74 = por %p72, %p73
    %p75 = scmp.ne.s32.totalorder %s67, %s70
    %p76 = scmp.eq.s32.totalorder %s10, 0
    %p77 = por %p75, %p76
    %p78 = scmp.ne.s32.totalorder %s67, %s70
    %p79 = scmp.eq.s32.totalorder %s15, 1
    %p80 = por %p78, %p79
    %p81 = scmp.ne.s32.totalorder %s70, %s71
    %p82 = scmp.eq.s32.totalorder %s15, 0
    %p83 = por %p81, %p82
    %p84 = scmp.ne.s32.totalorder %s70, %s71
    %p85 = scmp.eq.s32.totalorder %s16, 1
    %p86 = por %p84, %p85
    %p88 = scmp.ne.s32.totalorder %s71, %s87
    %p89 = scmp.eq.s32.totalorder %s16, 0
    %p90 = por %p88, %p89
    %s91 = ssub.s32 %s10, %s17
    %p92 = scmp.eq.s32.totalorder %s91, 0
    %s94 = sadd.s32 %s93, 1
    %s95 = scalar_select %p92, %s93, %s94
    %p98 = pneg %p92
    %p99 = scmp.eq.s32.totalorder %s10, 1
    %p100 = por %p98, %p99
    %p101 = scmp.ne.s32.totalorder %s93, %s96
    %p102 = scmp.eq.s32.totalorder %s10, 0
    %p103 = por %p101, %p102
    %p104 = scmp.ne.s32.totalorder %s93, %s96
    %p105 = scmp.eq.s32.totalorder %s15, 1
    %p106 = por %p104, %p105
    %p107 = scmp.ne.s32.totalorder %s96, %s97
    %p108 = scmp.eq.s32.totalorder %s15, 0
    %p109 = por %p107, %p108
    %p110 = scmp.ne.s32.totalorder %s96, %s97
    %p111 = scmp.eq.s32.totalorder %s16, 1
    %p112 = por %p110, %p111
    %p114 = scmp.ne.s32.totalorder %s97, %s113
    %p115 = scmp.eq.s32.totalorder %s16, 0
    %p116 = por %p114, %p115
    %p117 = scmp.le.s32.totalorder 1, %s10
    %p118 = scmp.lt.s32.totalorder %s10, 3
    %p119 = pnand %p117, %p118
    %p120 = pneg %p119
    // Predicated region
    $region9: #{atrous_module_forward.2} parent=5 // pred_check
      _
    $region10: #{atrous_module_forward.2} parent=5 // pred_check_branch
      %122 = sbr.rel (%p119) target = $region12
    $region11: #{atrous_module_forward.2} parent=5 // pred_region
      %s123 = ssub.s32 %s10, 1
      // Predicated region
      $region13: #{atrous_module_forward.2} parent=11 // pred_check
        %p124 = pneg %p57
      $region14: #{atrous_module_forward.2} parent=11 // pred_check_branch
        %126 = sbr.rel (%p124) target = $region16
      $region15: #{atrous_module_forward.2} parent=11 // pred_region
        _
      $region16: #{atrous_module_forward.2} parent=11 // pred_fallthru
        _
    $region12: #{atrous_module_forward.2} parent=5 // pred_fallthru
      _
    %p127 = scmp.lt.s32.totalorder %s10, 2
    // Predicated region
    $region17: #{atrous_module_forward.2} parent=5 // pred_check
      %p128 = pneg %p127
    $region18: #{atrous_module_forward.2} parent=5 // pred_check_branch
      %130 = sbr.rel (%p128) target = $region20
    $region19: #{atrous_module_forward.2} parent=5 // pred_region
      // Predicated region
      $region21: #{atrous_module_forward.2} parent=19 // pred_check
        %p131 = pneg %p30
      $region22: #{atrous_module_forward.2} parent=19 // pred_check_branch
        %133 = sbr.rel (%p131) target = $region24
      $region23: #{atrous_module_forward.2} parent=19 // pred_region
        %p134 = scmp.lt.s32.totalorder %s10, 1
        %s135 = scalar_select %p134, %s10, 1
        %s136 = smul.addr %s135, 9
        %s137 = smul.addr %s136, 4
        %s138 = scalar_lea.vmem %s0, %s137
      $region24: #{atrous_module_forward.2} parent=19 // pred_fallthru
        _
    $region20: #{atrous_module_forward.2} parent=5 // pred_fallthru
      _
    %p139 = scmp.le.s32.totalorder 1, %s10
    %p140 = scmp.lt.s32.totalorder %s10, 3
    %p141 = pnand %p139, %p140
    %p142 = pneg %p141
    // Predicated region
    $region25: #{atrous_module_forward.2} parent=5 // pred_check
      _
    $region26: #{atrous_module_forward.2} parent=5 // pred_check_branch
      %144 = sbr.rel (%p141) target = $region28
    $region27: #{atrous_module_forward.2} parent=5 // pred_region
      %s145 = ssub.s32 %s10, 1
      %p146 = scmp.lt.s32.totalorder %s15, 1
      %s147 = scalar_select %p146, %s15, 1
      %s148 = smul.addr %s147, 9
      %s149 = smul.addr %s148, 4
      %s150 = scalar_lea.vmem %s0, %s149
      %p151 = pneg %p36
      %p152 = pneg %p33
      %p153 = pneg %p57
      %p154 = pneg %p54
      %p155 = pneg %p83
      %p156 = pneg %p80
      %p157 = scmp.lt.s32.totalorder %s15, 1
      %s158 = scalar_select %p157, %s15, 1
      %s159 = smul.addr %s158, 2
      %s160 = smul.addr %s159, 8
      %s161 = scalar_lea.vmem %s2, %s160
      %p162 = pneg %p109
      %p163 = pneg %p106
      %p164 = scmp.lt.s32.totalorder %s15, 1
      %s165 = scalar_select %p164, %s15, 1
      %s166 = smul.addr %s165, 2
      %s167 = smul.addr %s166, 8
      %s168 = scalar_lea.vmem %s3, %s167
      %p169 = scmp.lt.s32.totalorder %s15, 1
      %s170 = scalar_select %p169, %s15, 1
      %s171 = smul.addr %s170, 9
      %s172 = smul.addr %s171, 4
      %s173 = scalar_lea.vmem %s0, %s172
      %p174 = scmp.lt.s32.totalorder %s15, 1
      %s175 = scalar_select %p174, %s15, 1
      %s176 = smul.addr %s175, 2
      %s177 = smul.addr %s176, 8
      %s178 = scalar_lea.vmem %s2, %s177
      %p179 = scmp.lt.s32.totalorder %s15, 1
      %s180 = scalar_select %p179, %s15, 1
      %s181 = smul.addr %s180, 2
      %s182 = smul.addr %s181, 8
      %s183 = scalar_lea.vmem %s3, %s182
      %v184 = vld [vmem:[%s173] sm:$0xff]
      %v185 = vld [vmem:[%s1] sm:$0xff]
      %s186 = scalar_lea.vmem %s173, 12
      %v187 = vld [vmem:[%s186] sm:$0xff]
      %s188 = scalar_lea.vmem %s1, 8
      %v189 = vld [vmem:[%s188] sm:$0xff]
      %191 = vst [vmem:[#allocation1] ss:$2 sm:$0xff] %v187
      %v192 = vld.sshfl [vmem:[#allocation1] sm:$0xff pattern:$0x75316420]
      %v193 = vld.sshfl [vmem:[#allocation1 + $0x8] sm:$0xff pattern:$0x75316420]
      %vm194 = vcmask 31744
      %v196 = vsel %vm194, %v189, 0
      %vm198 = vcmask 1043456
      %v199 = vsel %vm198, %v192, 0
      %v201 = vsel %vm198, %v193, 0
      %203 = vmatpush.msra.mxu0 0.0
      %204 = vmatpush.msra.mxu0 0.0
      %205 = vmatpush.msra.mxu0 0.0
      %206 = vmatpush.msra.mxu0 0.0
      %207 = vmatpush.msra.mxu0 0.0
      %208 = vmatpush.msra.mxu0 0.0
      %209 = vmatpush.msra.mxu0 0.0
      %210 = vmatpush.msra.mxu0 0.0
      %211 = vmatpush.msra.mxu0 0.0
      %212 = vmatpush.msra.mxu0 0.0
      %213 = vmatpush.msra.mxu0 0.0
      %214 = vmatpush.msra.mxu0 0.0
      %215 = vmatpush.msra.mxu0 0.0
      %216 = vmatpush.msra.mxu0 0.0
      %217 = vmatpush.msra.mxu0 0.0
      %218 = vmatpush.msra.mxu0 %v199
      %219 = vmatmul.f32.gmra.mxu0 %v196
      %v220 = vpop.f32.mrf.mxu0
      %v221 = vadd.f32 0.0, %v220
      %222 = vdwg.mxu0
      %223 = vmatpush.msra.mxu0 0.0
      %224 = vmatpush.msra.mxu0 0.0
      %225 = vmatpush.msra.mxu0 0.0
      %226 = vmatpush.msra.mxu0 0.0
      %227 = vmatpush.msra.mxu0 0.0
      %228 = vmatpush.msra.mxu0 0.0
      %229 = vmatpush.msra.mxu0 0.0
      %230 = vmatpush.msra.mxu0 0.0
      %231 = vmatpush.msra.mxu0 0.0
      %232 = vmatpush.msra.mxu0 0.0
      %233 = vmatpush.msra.mxu0 0.0
      %234 = vmatpush.msra.mxu0 0.0
      %235 = vmatpush.msra.mxu0 0.0
      %236 = vmatpush.msra.mxu0 0.0
      %237 = vmatpush.msra.mxu0 0.0
      %238 = vmatpush.msra.mxu0 %v201
      %239 = vmatmul.f32.gmra.mxu0 %v196
      %v240 = vpop.f32.mrf.mxu0
      %v241 = vadd.f32 0.0, %v240
      %242 = vdwg.mxu0
      %244 = vst [vmem:[#allocation1] ss:$2 sm:$0xff] %v184
      %v245 = vld.sshfl [vmem:[#allocation1] sm:$0xff pattern:$0x75316420]
      %v246 = vld.sshfl [vmem:[#allocation1 + $0x8] sm:$0xff pattern:$0x75316420]
      %v248 = vsel %vm194, %v185, 0
      %v250 = vsel %vm198, %v245, 0
      %v252 = vsel %vm198, %v246, 0
      %254 = vmatpush.msra.mxu0 0.0
      %255 = vmatpush.msra.mxu0 0.0
      %256 = vmatpush.msra.mxu0 0.0
      %257 = vmatpush.msra.mxu0 0.0
      %258 = vmatpush.msra.mxu0 0.0
      %259 = vmatpush.msra.mxu0 0.0
      %260 = vmatpush.msra.mxu0 0.0
      %261 = vmatpush.msra.mxu0 0.0
      %262 = vmatpush.msra.mxu0 0.0
      %263 = vmatpush.msra.mxu0 0.0
      %264 = vmatpush.msra.mxu0 0.0
      %265 = vmatpush.msra.mxu0 0.0
      %266 = vmatpush.msra.mxu0 0.0
      %267 = vmatpush.msra.mxu0 0.0
      %268 = vmatpush.msra.mxu0 0.0
      %269 = vmatpush.msra.mxu0 %v250
      %270 = vmatmul.f32.gmra.mxu0 %v248
      %v271 = vpop.f32.mrf.mxu0
      %v272 = vadd.f32 %v221, %v271
      %273 = vdwg.mxu0
      %274 = vmatpush.msra.mxu0 0.0
      %275 = vmatpush.msra.mxu0 0.0
      %276 = vmatpush.msra.mxu0 0.0
      %277 = vmatpush.msra.mxu0 0.0
      %278 = vmatpush.msra.mxu0 0.0
      %279 = vmatpush.msra.mxu0 0.0
      %280 = vmatpush.msra.mxu0 0.0
      %281 = vmatpush.msra.mxu0 0.0
      %282 = vmatpush.msra.mxu0 0.0
      %283 = vmatpush.msra.mxu0 0.0
      %284 = vmatpush.msra.mxu0 0.0
      %285 = vmatpush.msra.mxu0 0.0
      %286 = vmatpush.msra.mxu0 0.0
      %287 = vmatpush.msra.mxu0 0.0
      %288 = vmatpush.msra.mxu0 0.0
      %289 = vmatpush.msra.mxu0 %v252
      %290 = vmatmul.f32.gmra.mxu0 %v248
      %v291 = vpop.f32.mrf.mxu0
      %v292 = vadd.f32 %v241, %v291
      %293 = vdwg.mxu0
      %s294 = scalar_lea.vmem %s173, 24
      %v295 = vld [vmem:[%s294] sm:$0xff]
      %s296 = scalar_lea.vmem %s1, 16
      %v297 = vld [vmem:[%s296] sm:$0xff]
      %299 = vst [vmem:[#allocation1] ss:$2 sm:$0xff] %v295
      %v300 = vld.sshfl [vmem:[#allocation1] sm:$0xff pattern:$0x75316420]
      %v301 = vld.sshfl [vmem:[#allocation1 + $0x8] sm:$0xff pattern:$0x75316420]
      %v303 = vsel %vm194, %v297, 0
      %v305 = vsel %vm198, %v300, 0
      %v307 = vsel %vm198, %v301, 0
      %309 = vmatpush.msra.mxu0 0.0
      %310 = vmatpush.msra.mxu0 0.0
      %311 = vmatpush.msra.mxu0 0.0
      %312 = vmatpush.msra.mxu0 0.0
      %313 = vmatpush.msra.mxu0 0.0
      %314 = vmatpush.msra.mxu0 0.0
      %315 = vmatpush.msra.mxu0 0.0
      %316 = vmatpush.msra.mxu0 0.0
      %317 = vmatpush.msra.mxu0 0.0
      %318 = vmatpush.msra.mxu0 0.0
      %319 = vmatpush.msra.mxu0 0.0
      %320 = vmatpush.msra.mxu0 0.0
      %321 = vmatpush.msra.mxu0 0.0
      %322 = vmatpush.msra.mxu0 0.0
      %323 = vmatpush.msra.mxu0 0.0
      %324 = vmatpush.msra.mxu0 %v305
      %325 = vmatmul.f32.gmra.mxu0 %v303
      %v326 = vpop.f32.mrf.mxu0
      %v327 = vadd.f32 0.0, %v326
      %328 = vdwg.mxu0
      %329 = vmatpush.msra.mxu0 0.0
      %330 = vmatpush.msra.mxu0 0.0
      %331 = vmatpush.msra.mxu0 0.0
      %332 = vmatpush.msra.mxu0 0.0
      %333 = vmatpush.msra.mxu0 0.0
      %334 = vmatpush.msra.mxu0 0.0
      %335 = vmatpush.msra.mxu0 0.0
      %336 = vmatpush.msra.mxu0 0.0
      %337 = vmatpush.msra.mxu0 0.0
      %338 = vmatpush.msra.mxu0 0.0
      %339 = vmatpush.msra.mxu0 0.0
      %340 = vmatpush.msra.mxu0 0.0
      %341 = vmatpush.msra.mxu0 0.0
      %342 = vmatpush.msra.mxu0 0.0
      %343 = vmatpush.msra.mxu0 0.0
      %344 = vmatpush.msra.mxu0 %v307
      %345 = vmatmul.f32.gmra.mxu0 %v303
      %v346 = vpop.f32.mrf.mxu0
      %v347 = vadd.f32 0.0, %v346
      %348 = vdwg.mxu0
      %v349 = vadd.f32 %v272, %v327
      %v350 = vadd.f32 %v292, %v347
      %v351 = vld [vmem:[%s173] sm:$0xff]
      %v352 = vld [vmem:[%s173 + $0x8] sm:$0xf]
      %s353 = scalar_lea.vmem %s1, 24
      %v354 = vld [vmem:[%s353] sm:$0xff]
      %357 = vst [vmem:[#allocation1] ss:$2 sm:$0xff] %v351
      %s358 = scalar_lea.vmem [#allocation1], 16
      %359 = vst [vmem:[%s358] ss:$2 sm:$0xff] %v352
      %v360 = vld.sshfl [vmem:[#allocation1] sm:$0xff pattern:$0x75316420]
      %v361 = vld.sshfl [vmem:[#allocation1 + $0x8] sm:$0xff pattern:$0x75316420]
      %v362 = vld.sshfl [vmem:[#allocation1 + $0x10] sm:$0xff pattern:$0x75316420]
      %363 = vrot.lane.b32.xlu0 %v360, 96
      %v364 = vpop.permute.xlu0 %363
      %365 = vrot.lane.b32.xlu0 %v361, 96
      %v366 = vpop.permute.xlu0 %365
      %367 = vrot.lane.b32.xlu0 %v362, 96
      %v368 = vpop.permute.xlu0 %367
      %vm369 = vcmask 785408
      %v370 = vsel %vm369, %v364, %v366
      %v371 = vsel %vm369, %v366, %v368
      %v373 = vsel %vm194, %v354, 0
      %v375 = vsel %vm198, %v370, 0
      %v377 = vsel %vm198, %v371, 0
      %379 = vmatpush.msra.mxu0 0.0
      %380 = vmatpush.msra.mxu0 0.0
      %381 = vmatpush.msra.mxu0 0.0
      %382 = vmatpush.msra.mxu0 0.0
      %383 = vmatpush.msra.mxu0 0.0
      %384 = vmatpush.msra.mxu0 0.0
      %385 = vmatpush.msra.mxu0 0.0
      %386 = vmatpush.msra.mxu0 0.0
      %387 = vmatpush.msra.mxu0 0.0
      %388 = vmatpush.msra.mxu0 0.0
      %389 = vmatpush.msra.mxu0 0.0
      %390 = vmatpush.msra.mxu0 0.0
      %391 = vmatpush.msra.mxu0 0.0
      %392 = vmatpush.msra.mxu0 0.0
      %393 = vmatpush.msra.mxu0 0.0
      %394 = vmatpush.msra.mxu0 %v375
      %395 = vmatmul.f32.gmra.mxu0 %v373
      %v396 = vpop.f32.mrf.mxu0
      %v397 = vadd.f32 0.0, %v396
      %398 = vdwg.mxu0
      %399 = vmatpush.msra.mxu0 0.0
      %400 = vmatpush.msra.mxu0 0.0
      %401 = vmatpush.msra.mxu0 0.0
      %402 = vmatpush.msra.mxu0 0.0
      %403 = vmatpush.msra.mxu0 0.0
      %404 = vmatpush.msra.mxu0 0.0
      %405 = vmatpush.msra.mxu0 0.0
      %406 = vmatpush.msra.mxu0 0.0
      %407 = vmatpush.msra.mxu0 0.0
      %408 = vmatpush.msra.mxu0 0.0
      %409 = vmatpush.msra.mxu0 0.0
      %410 = vmatpush.msra.mxu0 0.0
      %411 = vmatpush.msra.mxu0 0.0
      %412 = vmatpush.msra.mxu0 0.0
      %413 = vmatpush.msra.mxu0 0.0
      %414 = vmatpush.msra.mxu0 %v377
      %415 = vmatmul.f32.gmra.mxu0 %v373
      %v416 = vpop.f32.mrf.mxu0
      %v417 = vadd.f32 0.0, %v416
      %418 = vdwg.mxu0
      %v419 = vadd.f32 %v349, %v397
      %v420 = vadd.f32 %v350, %v417
      %v421 = vld [vmem:[%s186] sm:$0xff]
      %v422 = vld [vmem:[%s186 + $0x8] sm:$0xf]
      %s423 = scalar_lea.vmem %s1, 32
      %v424 = vld [vmem:[%s423] sm:$0xff]
      %427 = vst [vmem:[#allocation1] ss:$2 sm:$0xff] %v421
      %s428 = scalar_lea.vmem [#allocation1], 16
      %429 = vst [vmem:[%s428] ss:$2 sm:$0xff] %v422
      %v430 = vld.sshfl [vmem:[#allocation1] sm:$0xff pattern:$0x75316420]
      %v431 = vld.sshfl [vmem:[#allocation1 + $0x8] sm:$0xff pattern:$0x75316420]
      %v432 = vld.sshfl [vmem:[#allocation1 + $0x10] sm:$0xff pattern:$0x75316420]
      %433 = vrot.lane.b32.xlu0 %v430, 96
      %v434 = vpop.permute.xlu0 %433
      %435 = vrot.lane.b32.xlu0 %v431, 96
      %v436 = vpop.permute.xlu0 %435
      %437 = vrot.lane.b32.xlu0 %v432, 96
      %v438 = vpop.permute.xlu0 %437
      %v439 = vsel %vm369, %v434, %v436
      %v440 = vsel %vm369, %v436, %v438
      %v442 = vsel %vm194, %v424, 0
      %v444 = vsel %vm198, %v439, 0
      %v446 = vsel %vm198, %v440, 0
      %448 = vmatpush.msra.mxu0 0.0
      %449 = vmatpush.msra.mxu0 0.0
      %450 = vmatpush.msra.mxu0 0.0
      %451 = vmatpush.msra.mxu0 0.0
      %452 = vmatpush.msra.mxu0 0.0
      %453 = vmatpush.msra.mxu0 0.0
      %454 = vmatpush.msra.mxu0 0.0
      %455 = vmatpush.msra.mxu0 0.0
      %456 = vmatpush.msra.mxu0 0.0
      %457 = vmatpush.msra.mxu0 0.0
      %458 = vmatpush.msra.mxu0 0.0
      %459 = vmatpush.msra.mxu0 0.0
      %460 = vmatpush.msra.mxu0 0.0
      %461 = vmatpush.msra.mxu0 0.0
      %462 = vmatpush.msra.mxu0 0.0
      %463 = vmatpush.msra.mxu0 %v444
      %464 = vmatmul.f32.gmra.mxu0 %v442
      %v465 = vpop.f32.mrf.mxu0
      %v466 = vadd.f32 0.0, %v465
      %467 = vdwg.mxu0
      %468 = vmatpush.msra.mxu0 0.0
      %469 = vmatpush.msra.mxu0 0.0
      %470 = vmatpush.msra.mxu0 0.0
      %471 = vmatpush.msra.mxu0 0.0
      %472 = vmatpush.msra.mxu0 0.0
      %473 = vmatpush.msra.mxu0 0.0
      %474 = vmatpush.msra.mxu0 0.0
      %475 = vmatpush.msra.mxu0 0.0
      %476 = vmatpush.msra.mxu0 0.0
      %477 = vmatpush.msra.mxu0 0.0
      %478 = vmatpush.msra.mxu0 0.0
      %479 = vmatpush.msra.mxu0 0.0
      %480 = vmatpush.msra.mxu0 0.0
      %481 = vmatpush.msra.mxu0 0.0
      %482 = vmatpush.msra.mxu0 0.0
      %483 = vmatpush.msra.mxu0 %v446
      %484 = vmatmul.f32.gmra.mxu0 %v442
      %v485 = vpop.f32.mrf.mxu0
      %v486 = vadd.f32 0.0, %v485
      %487 = vdwg.mxu0
      %v488 = vadd.f32 %v419, %v466
      %v489 = vadd.f32 %v420, %v486
      %v490 = vld [vmem:[%s294] sm:$0xff]
      %v491 = vld [vmem:[%s294 + $0x8] sm:$0xf]
      %s492 = scalar_lea.vmem %s1, 40
      %v493 = vld [vmem:[%s492] sm:$0xff]
      %496 = vst [vmem:[#allocation1] ss:$2 sm:$0xff] %v490
      %s497 = scalar_lea.vmem [#allocation1], 16
      %498 = vst [vmem:[%s497] ss:$2 sm:$0xff] %v491
      %v499 = vld.sshfl [vmem:[#allocation1] sm:$0xff pattern:$0x75316420]
      %v500 = vld.sshfl [vmem:[#allocation1 + $0x8] sm:$0xff pattern:$0x75316420]
      %v501 = vld.sshfl [vmem:[#allocation1 + $0x10] sm:$0xff pattern:$0x75316420]
      %502 = vrot.lane.b32.xlu0 %v499, 96
      %v503 = vpop.permute.xlu0 %502
      %504 = vrot.lane.b32.xlu0 %v500, 96
      %v505 = vpop.permute.xlu0 %504
      %506 = vrot.lane.b32.xlu0 %v501, 96
      %v507 = vpop.permute.xlu0 %506
      %v508 = vsel %vm369, %v503, %v505
      %v509 = vsel %vm369, %v505, %v507
      %v511 = vsel %vm194, %v493, 0
      %v513 = vsel %vm198, %v508, 0
      %v515 = vsel %vm198, %v509, 0
      %517 = vmatpush.msra.mxu0 0.0
      %518 = vmatpush.msra.mxu0 0.0
      %519 = vmatpush.msra.mxu0 0.0
      %520 = vmatpush.msra.mxu0 0.0
      %521 = vmatpush.msra.mxu0 0.0
      %522 = vmatpush.msra.mxu0 0.0
      %523 = vmatpush.msra.mxu0 0.0
      %524 = vmatpush.msra.mxu0 0.0
      %525 = vmatpush.msra.mxu0 0.0
      %526 = vmatpush.msra.mxu0 0.0
      %527 = vmatpush.msra.mxu0 0.0
      %528 = vmatpush.msra.mxu0 0.0
      %529 = vmatpush.msra.mxu0 0.0
      %530 = vmatpush.msra.mxu0 0.0
      %531 = vmatpush.msra.mxu0 0.0
      %532 = vmatpush.msra.mxu0 %v513
      %533 = vmatmul.f32.gmra.mxu0 %v511
      %v534 = vpop.f32.mrf.mxu0
      %v535 = vadd.f32 0.0, %v534
      %536 = vdwg.mxu0
      %537 = vmatpush.msra.mxu0 0.0
      %538 = vmatpush.msra.mxu0 0.0
      %539 = vmatpush.msra.mxu0 0.0
      %540 = vmatpush.msra.mxu0 0.0
      %541 = vmatpush.msra.mxu0 0.0
      %542 = vmatpush.msra.mxu0 0.0
      %543 = vmatpush.msra.mxu0 0.0
      %544 = vmatpush.msra.mxu0 0.0
      %545 = vmatpush.msra.mxu0 0.0
      %546 = vmatpush.msra.mxu0 0.0
      %547 = vmatpush.msra.mxu0 0.0
      %548 = vmatpush.msra.mxu0 0.0
      %549 = vmatpush.msra.mxu0 0.0
      %550 = vmatpush.msra.mxu0 0.0
      %551 = vmatpush.msra.mxu0 0.0
      %552 = vmatpush.msra.mxu0 %v515
      %553 = vmatmul.f32.gmra.mxu0 %v511
      %v554 = vpop.f32.mrf.mxu0
      %v555 = vadd.f32 0.0, %v554
      %556 = vdwg.mxu0
      %v557 = vadd.f32 %v488, %v535
      %v558 = vadd.f32 %v489, %v555
      %v559 = vld [vmem:[%s173] sm:$0xff]
      %v560 = vld [vmem:[%s173 + $0x8] sm:$0xf]
      %s561 = scalar_lea.vmem %s1, 48
      %v562 = vld [vmem:[%s561] sm:$0xff]
      %565 = vst [vmem:[#allocation1] ss:$2 sm:$0xff] %v559
      %s566 = scalar_lea.vmem [#allocation1], 16
      %567 = vst [vmem:[%s566] ss:$2 sm:$0xff] %v560
      %v568 = vld.sshfl [vmem:[#allocation1] sm:$0xff pattern:$0x75316420]
      %v569 = vld.sshfl [vmem:[#allocation1 + $0x8] sm:$0xff pattern:$0x75316420]
      %v570 = vld.sshfl [vmem:[#allocation1 + $0x10] sm:$0xff pattern:$0x75316420]
      %571 = vrot.lane.b32.xlu0 %v568, 64
      %v572 = vpop.permute.xlu0 %571
      %573 = vrot.lane.b32.xlu0 %v569, 64
      %v574 = vpop.permute.xlu0 %573
      %575 = vrot.lane.b32.xlu0 %v570, 64
      %v576 = vpop.permute.xlu0 %575
      %vm577 = vcmask 523264
      %v578 = vsel %vm577, %v572, %v574
      %v579 = vsel %vm577, %v574, %v576
      %v581 = vsel %vm194, %v562, 0
      %v583 = vsel %vm198, %v578, 0
      %v585 = vsel %vm198, %v579, 0
      %587 = vmatpush.msra.mxu0 0.0
      %588 = vmatpush.msra.mxu0 0.0
      %589 = vmatpush.msra.mxu0 0.0
      %590 = vmatpush.msra.mxu0 0.0
      %591 = vmatpush.msra.mxu0 0.0
      %592 = vmatpush.msra.mxu0 0.0
      %593 = vmatpush.msra.mxu0 0.0
      %594 = vmatpush.msra.mxu0 0.0
      %595 = vmatpush.msra.mxu0 0.0
      %596 = vmatpush.msra.mxu0 0.0
      %597 = vmatpush.msra.mxu0 0.0
      %598 = vmatpush.msra.mxu0 0.0
      %599 = vmatpush.msra.mxu0 0.0
      %600 = vmatpush.msra.mxu0 0.0
      %601 = vmatpush.msra.mxu0 0.0
      %602 = vmatpush.msra.mxu0 %v583
      %603 = vmatmul.f32.gmra.mxu0 %v581
      %v604 = vpop.f32.mrf.mxu0
      %v605 = vadd.f32 0.0, %v604
      %606 = vdwg.mxu0
      %607 = vmatpush.msra.mxu0 0.0
      %608 = vmatpush.msra.mxu0 0.0
      %609 = vmatpush.msra.mxu0 0.0
      %610 = vmatpush.msra.mxu0 0.0
      %611 = vmatpush.msra.mxu0 0.0
      %612 = vmatpush.msra.mxu0 0.0
      %613 = vmatpush.msra.mxu0 0.0
      %614 = vmatpush.msra.mxu0 0.0
      %615 = vmatpush.msra.mxu0 0.0
      %616 = vmatpush.msra.mxu0 0.0
      %617 = vmatpush.msra.mxu0 0.0
      %618 = vmatpush.msra.mxu0 0.0
      %619 = vmatpush.msra.mxu0 0.0
      %620 = vmatpush.msra.mxu0 0.0
      %621 = vmatpush.msra.mxu0 0.0
      %622 = vmatpush.msra.mxu0 %v585
      %623 = vmatmul.f32.gmra.mxu0 %v581
      %v624 = vpop.f32.mrf.mxu0
      %v625 = vadd.f32 0.0, %v624
      %626 = vdwg.mxu0
      %v627 = vadd.f32 %v557, %v605
      %v628 = vadd.f32 %v558, %v625
      %v629 = vld [vmem:[%s186] sm:$0xff]
      %v630 = vld [vmem:[%s186 + $0x8] sm:$0xf]
      %s631 = scalar_lea.vmem %s1, 56
      %v632 = vld [vmem:[%s631] sm:$0xff]
      %635 = vst [vmem:[#allocation1] ss:$2 sm:$0xff] %v629
      %s636 = scalar_lea.vmem [#allocation1], 16
      %637 = vst [vmem:[%s636] ss:$2 sm:$0xff] %v630
      %v638 = vld.sshfl [vmem:[#allocation1] sm:$0xff pattern:$0x75316420]
      %v639 = vld.sshfl [vmem:[#allocation1 + $0x8] sm:$0xff pattern:$0x75316420]
      %v640 = vld.sshfl [vmem:[#allocation1 + $0x10] sm:$0xff pattern:$0x75316420]
      %641 = vrot.lane.b32.xlu0 %v638, 64
      %v642 = vpop.permute.xlu0 %641
      %643 = vrot.lane.b32.xlu0 %v639, 64
      %v644 = vpop.permute.xlu0 %643
      %645 = vrot.lane.b32.xlu0 %v640, 64
      %v646 = vpop.permute.xlu0 %645
      %v647 = vsel %vm577, %v642, %v644
      %v648 = vsel %vm577, %v644, %v646
      %v650 = vsel %vm194, %v632, 0
      %v652 = vsel %vm198, %v647, 0
      %v654 = vsel %vm198, %v648, 0
      %656 = vmatpush.msra.mxu0 0.0
      %657 = vmatpush.msra.mxu0 0.0
      %658 = vmatpush.msra.mxu0 0.0
      %659 = vmatpush.msra.mxu0 0.0
      %660 = vmatpush.msra.mxu0 0.0
      %661 = vmatpush.msra.mxu0 0.0
      %662 = vmatpush.msra.mxu0 0.0
      %663 = vmatpush.msra.mxu0 0.0
      %664 = vmatpush.msra.mxu0 0.0
      %665 = vmatpush.msra.mxu0 0.0
      %666 = vmatpush.msra.mxu0 0.0
      %667 = vmatpush.msra.mxu0 0.0
      %668 = vmatpush.msra.mxu0 0.0
      %669 = vmatpush.msra.mxu0 0.0
      %670 = vmatpush.msra.mxu0 0.0
      %671 = vmatpush.msra.mxu0 %v652
      %672 = vmatmul.f32.gmra.mxu0 %v650
      %v673 = vpop.f32.mrf.mxu0
      %v674 = vadd.f32 0.0, %v673
      %675 = vdwg.mxu0
      %676 = vmatpush.msra.mxu0 0.0
      %677 = vmatpush.msra.mxu0 0.0
      %678 = vmatpush.msra.mxu0 0.0
      %679 = vmatpush.msra.mxu0 0.0
      %680 = vmatpush.msra.mxu0 0.0
      %681 = vmatpush.msra.mxu0 0.0
      %682 = vmatpush.msra.mxu0 0.0
      %683 = vmatpush.msra.mxu0 0.0
      %684 = vmatpush.msra.mxu0 0.0
      %685 = vmatpush.msra.mxu0 0.0
      %686 = vmatpush.msra.mxu0 0.0
      %687 = vmatpush.msra.mxu0 0.0
      %688 = vmatpush.msra.mxu0 0.0
      %689 = vmatpush.msra.mxu0 0.0
      %690 = vmatpush.msra.mxu0 0.0
      %691 = vmatpush.msra.mxu0 %v654
      %692 = vmatmul.f32.gmra.mxu0 %v650
      %v693 = vpop.f32.mrf.mxu0
      %v694 = vadd.f32 0.0, %v693
      %695 = vdwg.mxu0
      %v696 = vadd.f32 %v627, %v674
      %v697 = vadd.f32 %v628, %v694
      %v698 = vld [vmem:[%s294] sm:$0xff]
      %v699 = vld [vmem:[%s294 + $0x8] sm:$0xf]
      %s700 = scalar_lea.vmem %s1, 64
      %v701 = vld [vmem:[%s700] sm:$0xff]
      %704 = vst [vmem:[#allocation1] ss:$2 sm:$0xff] %v698
      %s705 = scalar_lea.vmem [#allocation1], 16
      %706 = vst [vmem:[%s705] ss:$2 sm:$0xff] %v699
      %v707 = vld.sshfl [vmem:[#allocation1] sm:$0xff pattern:$0x75316420]
      %v708 = vld.sshfl [vmem:[#allocation1 + $0x8] sm:$0xff pattern:$0x75316420]
      %v709 = vld.sshfl [vmem:[#allocation1 + $0x10] sm:$0xff pattern:$0x75316420]
      %710 = vrot.lane.b32.xlu0 %v707, 64
      %v711 = vpop.permute.xlu0 %710
      %712 = vrot.lane.b32.xlu0 %v708, 64
      %v713 = vpop.permute.xlu0 %712
      %714 = vrot.lane.b32.xlu0 %v709, 64
      %v715 = vpop.permute.xlu0 %714
      %v716 = vsel %vm577, %v711, %v713
      %v717 = vsel %vm577, %v713, %v715
      %v719 = vsel %vm194, %v701, 0
      %v721 = vsel %vm198, %v716, 0
      %v723 = vsel %vm198, %v717, 0
      %725 = vmatpush.msra.mxu0 0.0
      %726 = vmatpush.msra.mxu0 0.0
      %727 = vmatpush.msra.mxu0 0.0
      %728 = vmatpush.msra.mxu0 0.0
      %729 = vmatpush.msra.mxu0 0.0
      %730 = vmatpush.msra.mxu0 0.0
      %731 = vmatpush.msra.mxu0 0.0
      %732 = vmatpush.msra.mxu0 0.0
      %733 = vmatpush.msra.mxu0 0.0
      %734 = vmatpush.msra.mxu0 0.0
      %735 = vmatpush.msra.mxu0 0.0
      %736 = vmatpush.msra.mxu0 0.0
      %737 = vmatpush.msra.mxu0 0.0
      %738 = vmatpush.msra.mxu0 0.0
      %739 = vmatpush.msra.mxu0 0.0
      %740 = vmatpush.msra.mxu0 %v721
      %741 = vmatmul.f32.gmra.mxu0 %v719
      %v742 = vpop.f32.mrf.mxu0
      %v743 = vadd.f32 0.0, %v742
      %744 = vdwg.mxu0
      %745 = vmatpush.msra.mxu0 0.0
      %746 = vmatpush.msra.mxu0 0.0
      %747 = vmatpush.msra.mxu0 0.0
      %748 = vmatpush.msra.mxu0 0.0
      %749 = vmatpush.msra.mxu0 0.0
      %750 = vmatpush.msra.mxu0 0.0
      %751 = vmatpush.msra.mxu0 0.0
      %752 = vmatpush.msra.mxu0 0.0
      %753 = vmatpush.msra.mxu0 0.0
      %754 = vmatpush.msra.mxu0 0.0
      %755 = vmatpush.msra.mxu0 0.0
      %756 = vmatpush.msra.mxu0 0.0
      %757 = vmatpush.msra.mxu0 0.0
      %758 = vmatpush.msra.mxu0 0.0
      %759 = vmatpush.msra.mxu0 0.0
      %760 = vmatpush.msra.mxu0 %v723
      %761 = vmatmul.f32.gmra.mxu0 %v719
      %v762 = vpop.f32.mrf.mxu0
      %v763 = vadd.f32 0.0, %v762
      %764 = vdwg.mxu0
      %v765 = vadd.f32 %v696, %v743
      %v766 = vadd.f32 %v697, %v763
      %767 = vst [vmem:[%s178] sm:$0xff] %v765
      %768 = vst [vmem:[%s178 + $0x8] sm:$0xff] %v766
      %v769 = vadd.f32 %v765, %v766
      %770 = vadd.xlane.f32.xlu0 %v769
      %v771 = vpop.xlane.xlu0 %770
      %vm772 = vcmask 7168
      %773 = vst.msk [vmem:[%s183] sm:$0xff] %vm772, %v771
      %v774 = vmul.f32 %v765, %v765
      %v775 = vmul.f32 %v766, %v766
      %v776 = vadd.f32 %v774, %v775
      %777 = vadd.xlane.f32.xlu0 %v776
      %v778 = vpop.xlane.xlu0 %777
      %s779 = scalar_lea.vmem %s183, 8
      %780 = vst.msk [vmem:[%s779] sm:$0xff] %vm772, %v778
      %p781 = scmp.lt.s32.totalorder %s15, 1
      %s782 = scalar_select %p781, %s15, 1
      %s783 = smul.addr %s782, 2
      %s784 = smul.addr %s783, 8
      %s785 = scalar_lea.vmem %s2, %s784
      %p786 = scmp.lt.s32.totalorder %s15, 1
      %s787 = scalar_select %p786, %s15, 1
      %s788 = smul.addr %s787, 2
      %s789 = smul.addr %s788, 8
      %s790 = scalar_lea.vmem %s3, %s789
      // Predicated region
      $region29: #{atrous_module_forward.2} parent=27 // pred_check
        %p791 = pneg %p80
      $region30: #{atrous_module_forward.2} parent=27 // pred_check_branch
        %793 = sbr.rel (%p791) target = $region32
      $region31: #{atrous_module_forward.2} parent=27 // pred_region
        _
      $region32: #{atrous_module_forward.2} parent=27 // pred_fallthru
        _
      // Predicated region
      $region33: #{atrous_module_forward.2} parent=27 // pred_check
        %p794 = pneg %p106
      $region34: #{atrous_module_forward.2} parent=27 // pred_check_branch
        %796 = sbr.rel (%p794) target = $region36
      $region35: #{atrous_module_forward.2} parent=27 // pred_region
        _
      $region36: #{atrous_module_forward.2} parent=27 // pred_fallthru
        _
    $region28: #{atrous_module_forward.2} parent=5 // pred_fallthru
      _
    %p797 = scmp.le.s32.totalorder 2, %s10
    // Predicated region
    $region37: #{atrous_module_forward.2} parent=5 // pred_check
      %p798 = pneg %p797
    $region38: #{atrous_module_forward.2} parent=5 // pred_check_branch
      %800 = sbr.rel (%p798) target = $region40
    $region39: #{atrous_module_forward.2} parent=5 // pred_region
      %s801 = ssub.s32 %s10, 2
      // Predicated region
      $region41: #{atrous_module_forward.2} parent=39 // pred_check
        %p802 = pneg %p86
      $region42: #{atrous_module_forward.2} parent=39 // pred_check_branch
        %804 = sbr.rel (%p802) target = $region44
      $region43: #{atrous_module_forward.2} parent=39 // pred_region
        %p805 = scmp.lt.s32.totalorder %s16, 1
        %s806 = scalar_select %p805, %s16, 1
        %s807 = smul.addr %s806, 2
        %s808 = smul.addr %s807, 8
        %s809 = scalar_lea.vmem %s2, %s808
      $region44: #{atrous_module_forward.2} parent=39 // pred_fallthru
        _
      // Predicated region
      $region45: #{atrous_module_forward.2} parent=39 // pred_check
        %p810 = pneg %p112
      $region46: #{atrous_module_forward.2} parent=39 // pred_check_branch
        %812 = sbr.rel (%p810) target = $region48
      $region47: #{atrous_module_forward.2} parent=39 // pred_region
        %p813 = scmp.lt.s32.totalorder %s16, 1
        %s814 = scalar_select %p813, %s16, 1
        %s815 = smul.addr %s814, 2
        %s816 = smul.addr %s815, 8
        %s817 = scalar_lea.vmem %s3, %s816
      $region48: #{atrous_module_forward.2} parent=39 // pred_fallthru
        _
    $region40: #{atrous_module_forward.2} parent=5 // pred_fallthru
      _
  $region6: #{atrous_module_forward.2} parent=0 // loop_footer
    %s14 = sadd.s32 1, %s10
  $region7: #{atrous_module_forward.2} parent=0 // loop_footer_branch
    %9 = sbr.rel target = $region3
  $region8: #{atrous_module_forward.2} parent=0 // loop_exit
    _

</llo_original>
